<compile_context>
chip_gen: v5e
topology: v5e:2x2
jax: 0.10.0
libtpu: 0.0.40
codegen_flags: <defaults>
</compile_context>

<pallas_src>
import math

import jax
import jax.numpy as jnp
from jax.experimental import pallas as pl
from jax.experimental.pallas import tpu as pltpu


def _round_up(x, m):
    return ((x + m - 1) // m) * m


def _vmem_capacity_bytes():
    """Per-core physical VMEM; conservative 64 MiB (v7x) fallback if the query fails."""
    try:
        info = pltpu.get_tpu_info()
        cap = getattr(info, "vmem_capacity_bytes", None)
        if cap:
            return int(cap)
    except Exception:
        pass
    return 64 << 20


def _gelu(h, approximate):
    if approximate:
        # tanh-approx GELU -> EUP slot, co-issues with the MXU (preferred for
        # bf16 kernels on v6e/v7x where exact erf can make the kernel VALU-bound).
        return jax.nn.gelu(h, approximate=True)
    # Exact erf GELU (matches torch.nn.GELU() default).
    return 0.5 * h * (1.0 + jax.lax.erf(h * (1.0 / math.sqrt(2.0))))


def _make_resident_kernel(approximate):
    # Weights fully VMEM-resident: single matmul pair, no accumulator needed.
    def kernel(x_ref, w1_ref, b1_ref, w2_ref, b2_ref, o_ref):
        h = jnp.dot(x_ref[...], w1_ref[...], preferred_element_type=jnp.float32)
        h = _gelu(h + b1_ref[...], approximate)
        o_ref[...] = (jnp.dot(h.astype(w2_ref.dtype), w2_ref[...],
                              preferred_element_type=jnp.float32)
                      + b2_ref[...]).astype(o_ref.dtype)
    return kernel


def _make_tiled_kernel(approximate):
    # Hidden dim tiled: f32 accumulator over hidden chunks, b2 folded into init.
    def kernel(x_ref, w1_ref, b1_ref, w2_ref, b2_ref, o_ref, acc_ref):
        j = pl.program_id(1)

        @pl.when(j == 0)
        def _():
            acc_ref[...] = jnp.broadcast_to(b2_ref[...], acc_ref.shape)

        h = jnp.dot(x_ref[...], w1_ref[...], preferred_element_type=jnp.float32)
        h = _gelu(h + b1_ref[...], approximate)
        acc_ref[...] += jnp.dot(h.astype(w2_ref.dtype), w2_ref[...],
                                preferred_element_type=jnp.float32)

        @pl.when(j == pl.num_programs(1) - 1)
        def _():
            o_ref[...] = acc_ref[...].astype(o_ref.dtype)
    return kernel


def mlp_forward(x, w1, b1, w2, b2, *, row_tile=512, hidden_tile=None,
                compute_dtype=None, gelu_approximate=False,
                single_buffer_weights=False):
    """x: (B, N, D). w1: (D, H), b1: (1, H), w2: (H, D), b2: (1, D).

    compute_dtype: dtype of the MXU operands (GELU/accumulation stay f32).
      jnp.bfloat16 is recommended on v6e/v7x; default keeps x.dtype (torch f32
      semantics).
    hidden_tile: None = auto (weights resident if they fit VMEM budget,
      otherwise pick the largest 128-multiple chunk that fits).
    """
    B, N, D = x.shape
    H = w1.shape[1]
    out_dtype = x.dtype
    cdt = jnp.dtype(compute_dtype) if compute_dtype is not None else jnp.dtype(x.dtype)
    itemsize = cdt.itemsize
    out_itemsize = jnp.dtype(out_dtype).itemsize

    M = B * N
    x2 = x.reshape(M, D)

    # --- Row tiling: sublane alignment is dtype-aware (f32:8, bf16:16, 8-bit:32).
    align = {4: 8, 2: 16, 1: 32}.get(itemsize, 8)
    row_tile = max(align, (row_tile // align) * align)
    tm = min(row_tile, _round_up(M, align))
    # Megacore (v7x has 2 TCs): keep >=2 row tiles when the row count allows,
    # so the parallel row axis gives both cores work.
    if _round_up(M, tm) // tm < 2 and M > 2 * align:
        tm = _round_up(-(-M // 2), align)
    M_pad = _round_up(M, tm)
    if M_pad != M:
        x2 = jnp.pad(x2, ((0, M_pad - M), (0, 0)))
    num_row_tiles = M_pad // tm

    # --- VMEM budgeting against the actual chip (64 MiB/TC on v7x, 128 MiB on v5e/v6e).
    vmem_cap = _vmem_capacity_bytes()
    budget = int(0.70 * vmem_cap)
    headroom = 2 << 20
    w_copies = 1 if single_buffer_weights else 2

    def resident_bytes():
        return (2 * tm * D * itemsize + 2 * tm * D * out_itemsize
                + w_copies * 2 * D * H * itemsize
                + 2 * (H + D) * 4 + headroom)

    def tiled_bytes(th_):
        return (2 * tm * D * itemsize + 2 * tm * D * out_itemsize
                + 2 * (D * th_ + th_ * D) * itemsize
                + 2 * (th_ + D) * 4 + tm * D * 4 + headroom)

    # --- Hidden-dim strategy: resident (1-D grid) vs tiled (2-D grid).
    th = None
    if hidden_tile is not None and H > hidden_tile:
        resident = False
        th = max(128, (hidden_tile // 128) * 128)
    elif hidden_tile is not None:
        resident = True
    else:
        resident = resident_bytes() <= budget
        if not resident:
            for cand in (1536, 1280, 1024, 768, 512, 384, 256, 128):
                th = min(cand, _round_up(H, 128))
                if tiled_bytes(th) <= budget:
                    break

    if resident:
        H_pad = H
    else:
        # Zero padding is exact: padded hidden units contribute 0 via W2's zero rows.
        H_pad = _round_up(H, th)
        if H_pad != H:
            w1 = jnp.pad(w1, ((0, 0), (0, H_pad - H)))
            b1 = jnp.pad(b1, ((0, 0), (0, H_pad - H)))
            w2 = jnp.pad(w2, ((0, H_pad - H), (0, 0)))

    # MXU operands in compute dtype (optionally bf16); biases stay f32.
    # TODO(synk): store weights in bf16/fp8 in HBM (with per-channel scales for
    # fp8 on v7x) so the cast here isn't a per-call XLA copy.
    x2c = x2.astype(cdt)
    w1c = w1.astype(cdt)
    w2c = w2.astype(cdt)
    b1c = b1.astype(jnp.float32)
    b2c = b2.astype(jnp.float32)

    est = resident_bytes() if resident else tiled_bytes(th)
    vmem_limit = int(min(max(est, 32 << 20), int(0.90 * vmem_cap)))

    # Cost estimate includes the actual weight (re-)stream traffic.
    weight_stream_bytes = (2 * D * H_pad * itemsize if resident
                           else num_row_tiles * 2 * D * H_pad * itemsize)
    cost = pl.CostEstimate(
        flops=int(4 * M_pad * D * H_pad),
        transcendentals=int(M_pad * H_pad),
        bytes_accessed=int(M_pad * D * (itemsize + out_itemsize)
                           + weight_stream_bytes + (H_pad + D) * 4),
    )

    if resident:
        w_kwargs = {}
        if single_buffer_weights:
            # Block index never changes -> one buffer suffices (saves a full
            # extra weight copy of VMEM on v7x's 64 MiB budget).
            w_kwargs = dict(pipeline_mode=pl.Buffered(1))
        grid_spec = pltpu.PrefetchScalarGridSpec(
            num_scalar_prefetch=0,
            grid=(num_row_tiles,),
            in_specs=[
                pl.BlockSpec((tm, D), lambda i: (i, 0)),               # x row tile
                pl.BlockSpec((D, H_pad), lambda i: (0, 0), **w_kwargs),  # W1 (resident)
                pl.BlockSpec((1, H_pad), lambda i: (0, 0)),            # b1
                pl.BlockSpec((H_pad, D), lambda i: (0, 0), **w_kwargs),  # W2 (resident)
                pl.BlockSpec((1, D), lambda i: (0, 0)),                # b2
            ],
            out_specs=pl.BlockSpec((tm, D), lambda i: (i, 0)),
        )
        kernel = _make_resident_kernel(gelu_approximate)
        dims = ("parallel",)
    else:
        grid_spec = pltpu.PrefetchScalarGridSpec(
            num_scalar_prefetch=0,
            grid=(num_row_tiles, H_pad // th),
            in_specs=[
                pl.BlockSpec((tm, D), lambda i, j: (i, 0)),   # x row tile
                pl.BlockSpec((D, th), lambda i, j: (0, j)),   # W1 hidden chunk
                pl.BlockSpec((1, th), lambda i, j: (0, j)),   # b1 hidden chunk
                pl.BlockSpec((th, D), lambda i, j: (j, 0)),   # W2 hidden chunk
                pl.BlockSpec((1, D), lambda i, j: (0, 0)),    # b2 (constant)
            ],
            out_specs=pl.BlockSpec((tm, D), lambda i, j: (i, 0)),
            scratch_shapes=[pltpu.VMEM((tm, D), jnp.float32)],
        )
        kernel = _make_tiled_kernel(gelu_approximate)
        dims = ("parallel", "arbitrary")

    out2 = pl.pallas_call(
        kernel,
        out_shape=jax.ShapeDtypeStruct((M_pad, D), out_dtype),
        grid_spec=grid_spec,
        compiler_params=pltpu.CompilerParams(
            dimension_semantics=dims,
            vmem_limit_bytes=vmem_limit,
        ),
        cost_estimate=cost,
    )(x2c, w1c, b1c, w2c, b2c)

    if M_pad != M:
        out2 = out2[:M]
    # Note: for D < 128 output stores are lane-masked; real ViT dims (D>=768)
    # are already lane-dense.
    return out2.reshape(B, N, D)


def init_mlp_params(key, vec_length, hidden_dim, dtype=jnp.float32):
    """Deterministic init mimicking torch.nn.Linear's uniform(-1/sqrt(in), 1/sqrt(in))."""
    k1, k2, k3, k4 = jax.random.split(key, 4)
    bound1 = 1.0 / math.sqrt(vec_length)
    bound2 = 1.0 / math.sqrt(hidden_dim)
    w1 = jax.random.uniform(k1, (vec_length, hidden_dim), dtype, -bound1, bound1)
    b1 = jax.random.uniform(k2, (1, hidden_dim), dtype, -bound1, bound1)
    w2 = jax.random.uniform(k3, (hidden_dim, vec_length), dtype, -bound2, bound2)
    b2 = jax.random.uniform(k4, (1, vec_length), dtype, -bound2, bound2)
    return w1, b1, w2, b2


def mlp_reference(x, w1, b1, w2, b2):
    h = x @ w1 + b1[0]
    h = 0.5 * h * (1.0 + jax.lax.erf(h / math.sqrt(2.0)))
    return h @ w2 + b2[0]


if __name__ == "__main__":
    batch, seq, vec_length, hidden_dim = 2, 8, 32, 256

    key = jax.random.PRNGKey(0)
    kx, kp = jax.random.split(key)
    x = jax.random.normal(kx, (batch, seq, vec_length), jnp.float32)
    w1, b1, w2, b2 = init_mlp_params(kp, vec_length, hidden_dim)
    ref = mlp_reference(x, w1, b1, w2, b2)

    # 1) Default path: weights fully VMEM-resident, 1-D row-parallel grid.
    out = jax.block_until_ready(mlp_forward(x, w1, b1, w2, b2))
    assert out.shape == (batch, seq, vec_length)
    assert jnp.allclose(out, ref, atol=1e-4, rtol=1e-4), "mismatch (resident path)"

    # 2) Hidden-tiled path with ragged rows: exercises the 2-D grid, the f32
    #    accumulator (b2 folded into init) and the row-padding logic.
    x_r = jax.random.normal(kx, (batch, 7, vec_length), jnp.float32)
    ref_r = mlp_reference(x_r, w1, b1, w2, b2)
    out_r = jax.block_until_ready(
        mlp_forward(x_r, w1, b1, w2, b2, row_tile=8, hidden_tile=128))
    assert out_r.shape == (batch, 7, vec_length)
    assert jnp.allclose(out_r, ref_r, atol=1e-4, rtol=1e-4), "mismatch (tiled path)"

    # 3) bf16 MXU-operand path (recommended default on v6e/v7x): f32 GELU and
    #    accumulation, loose tolerance for the bf16 operand rounding.
    out_bf = jax.block_until_ready(
        mlp_forward(x, w1, b1, w2, b2, compute_dtype=jnp.bfloat16))
    assert jnp.allclose(out_bf, ref, atol=5e-2, rtol=5e-2), "mismatch (bf16 path)"

    print("KERNEL_OK")
</pallas_src>

<mosaic_0001>
module attributes {stable_mosaic.version = 11 : i64} {
  func.func @kernel(%arg0: i32, %arg1: memref<16x32xf32, #tpu.memory_space<vmem>>, %arg2: memref<32x256xf32, #tpu.memory_space<vmem>>, %arg3: memref<1x256xf32, #tpu.memory_space<vmem>>, %arg4: memref<256x32xf32, #tpu.memory_space<vmem>>, %arg5: memref<1x32xf32, #tpu.memory_space<vmem>>, %arg6: memref<16x32xf32, #tpu.memory_space<vmem>>) attributes {dimension_semantics = [#tpu.dimension_semantics<parallel>], iteration_bounds = array<i64: 1>, scalar_prefetch = 0 : i64, scratch_operands = 0 : i64, tpu.core_type = #tpu.core_type<tc>, window_params = [{transform_indices = @transform_0, window_bounds = array<i64: 16, 32>}, {pipeline_mode = #tpu.pipeline_mode<synchronous>, transform_indices = @transform_1, window_bounds = array<i64: 32, 256>}, {pipeline_mode = #tpu.pipeline_mode<synchronous>, transform_indices = @transform_2, window_bounds = array<i64: 1, 256>}, {pipeline_mode = #tpu.pipeline_mode<synchronous>, transform_indices = @transform_3, window_bounds = array<i64: 256, 32>}, {pipeline_mode = #tpu.pipeline_mode<synchronous>, transform_indices = @transform_4, window_bounds = array<i64: 1, 32>}, {transform_indices = @transform_5, window_bounds = array<i64: 16, 32>}]} {
    %c0 = arith.constant 0 : index
    %c0_0 = arith.constant 0 : index
    %0 = vector.load %arg1[%c0, %c0_0] : memref<16x32xf32, #tpu.memory_space<vmem>>, vector<16x32xf32>
    %c0_1 = arith.constant 0 : index
    %c0_2 = arith.constant 0 : index
    %1 = vector.load %arg2[%c0_1, %c0_2] : memref<32x256xf32, #tpu.memory_space<vmem>>, vector<32x256xf32>
    %cst = arith.constant dense<0.000000e+00> : vector<16x256xf32>
    %2 = tpu.matmul %0, %1, %cst {dimension_numbers = #tpu.dot_dimension_numbers<[1], [0], [0], [1], [0, 0, 1, 1], [], []>} : vector<16x32xf32>, vector<32x256xf32>, vector<16x256xf32> -> vector<16x256xf32>
    %c0_3 = arith.constant 0 : index
    %c0_4 = arith.constant 0 : index
    %3 = vector.load %arg3[%c0_3, %c0_4] : memref<1x256xf32, #tpu.memory_space<vmem>>, vector<1x256xf32>
    %4 = vector.broadcast %3 : vector<1x256xf32> to vector<16x256xf32>
    %5 = arith.addf %2, %4 : vector<16x256xf32>
    %cst_5 = arith.constant 5.000000e-01 : f32
    %6 = vector.broadcast %cst_5 : f32 to vector<16x256xf32>
    %7 = arith.mulf %6, %5 : vector<16x256xf32>
    %cst_6 = arith.constant 0.707106769 : f32
    %8 = vector.broadcast %cst_6 : f32 to vector<16x256xf32>
    %9 = arith.mulf %5, %8 : vector<16x256xf32>
    %10 = math.erf %9 : vector<16x256xf32>
    %cst_7 = arith.constant 1.000000e+00 : f32
    %11 = vector.broadcast %cst_7 : f32 to vector<16x256xf32>
    %12 = arith.addf %11, %10 : vector<16x256xf32>
    %13 = arith.mulf %7, %12 : vector<16x256xf32>
    %c0_8 = arith.constant 0 : index
    %c0_9 = arith.constant 0 : index
    %14 = vector.load %arg4[%c0_8, %c0_9] : memref<256x32xf32, #tpu.memory_space<vmem>>, vector<256x32xf32>
    %cst_10 = arith.constant dense<0.000000e+00> : vector<16x32xf32>
    %15 = tpu.matmul %13, %14, %cst_10 {dimension_numbers = #tpu.dot_dimension_numbers<[1], [0], [0], [1], [0, 0, 1, 1], [], []>} : vector<16x256xf32>, vector<256x32xf32>, vector<16x32xf32> -> vector<16x32xf32>
    %c0_11 = arith.constant 0 : index
    %c0_12 = arith.constant 0 : index
    %16 = vector.load %arg5[%c0_11, %c0_12] : memref<1x32xf32, #tpu.memory_space<vmem>>, vector<1x32xf32>
    %17 = vector.broadcast %16 : vector<1x32xf32> to vector<16x32xf32>
    %18 = arith.addf %15, %17 : vector<16x32xf32>
    %c0_13 = arith.constant 0 : index
    %c0_14 = arith.constant 0 : index
    %19 = vector.load %arg6[%c0_13, %c0_14] : memref<16x32xf32, #tpu.memory_space<vmem>>, vector<16x32xf32>
    tpu.vector_store %arg6[%c0_13, %c0_14], %18 {strides = array<i32>} : memref<16x32xf32, #tpu.memory_space<vmem>>, vector<16x32xf32>,
    return
  }
  func.func @transform_0(%arg0: i32) -> (i32, i32) {
    %c0_i32 = arith.constant 0 : i32
    %c0_i32_0 = arith.constant 0 : i32
    return %arg0, %c0_i32 : i32, i32
  }
  func.func @transform_1(%arg0: i32) -> (i32, i32) {
    %c0_i32 = arith.constant 0 : i32
    %c0_i32_0 = arith.constant 0 : i32
    %c0_i32_1 = arith.constant 0 : i32
    return %c0_i32, %c0_i32_0 : i32, i32
  }
  func.func @transform_2(%arg0: i32) -> (i32, i32) {
    %c0_i32 = arith.constant 0 : i32
    %c0_i32_0 = arith.constant 0 : i32
    %c0_i32_1 = arith.constant 0 : i32
    return %c0_i32, %c0_i32_0 : i32, i32
  }
  func.func @transform_3(%arg0: i32) -> (i32, i32) {
    %c0_i32 = arith.constant 0 : i32
    %c0_i32_0 = arith.constant 0 : i32
    %c0_i32_1 = arith.constant 0 : i32
    return %c0_i32, %c0_i32_0 : i32, i32
  }
  func.func @transform_4(%arg0: i32) -> (i32, i32) {
    %c0_i32 = arith.constant 0 : i32
    %c0_i32_0 = arith.constant 0 : i32
    %c0_i32_1 = arith.constant 0 : i32
    return %c0_i32, %c0_i32_0 : i32, i32
  }
  func.func @transform_5(%arg0: i32) -> (i32, i32) {
    %c0_i32 = arith.constant 0 : i32
    %c0_i32_0 = arith.constant 0 : i32
    return %arg0, %c0_i32 : i32, i32
  }
}

</mosaic_0001>

<llo_original>
// kernel: tpu_custom_call.1
$region0: #{tpu_custom_call.1}
  #allocation0 [shape = 'u32[]', space=smem, size = 0x4, offset = 0x4, fixed_abs, tag = 'smem constant byte address 0x4 - core index']
  #allocation1 [shape = 'u32[72,128]{1,0:T(1,128)}', space=vmem, size = 0x9000, scoped, tag = 'internal scratch']
  %s0 = inlined_call_operand.vmem [shape: f32[16,32], index: 0, kind: input, shape index: {}]
  %s1 = inlined_call_operand.vmem [shape: f32[32,256], index: 1, kind: input, shape index: {}]
  %s2 = inlined_call_operand.vmem [shape: f32[1,256], index: 2, kind: input, shape index: {}]
  %s3 = inlined_call_operand.vmem [shape: f32[256,32], index: 3, kind: input, shape index: {}]
  %s4 = inlined_call_operand.vmem [shape: f32[1,32], index: 4, kind: input, shape index: {}]
  %s5 = inlined_call_operand.hbm [shape: f32[16,32], index: 5, kind: output, shape index: {}]
  %s6 = sld [smem:[#allocation0]]
  $region30: #{tpu_custom_call.1} parent=0
    _
  %s8 = ssub.s32 1, %s6
  %s9 = scalar_select 0, %s8, %s6
  $region1: #{tpu_custom_call.1} parent=0
    #allocation2 [shape = 'u8[8192]{0}', space=vmem, size = 0x2000, scoped, tag = 'output window, operand 0, single buffered']
    #allocation3 [shape = 's32[1]{0}', space=sflag, size = 0x4, scoped, tag = 'scoped memory for tpu_custom_call.1']
    %10 = vsyncpa [#allocation3], 0
    // Predicated region
    $region2: #{tpu_custom_call.1} parent=1 // pred_check
      _
    $region3: #{tpu_custom_call.1} parent=1 // pred_check_branch
      %12 = sbr.rel (0) target = $region5
    $region4: #{tpu_custom_call.1} parent=1 // pred_region
      _
    $region5: #{tpu_custom_call.1} parent=1 // pred_fallthru
      _
    // Predicated region
    $region6: #{tpu_custom_call.1} parent=1 // pred_check
      _
    $region7: #{tpu_custom_call.1} parent=1 // pred_check_branch
      %14 = sbr.rel (0) target = $region9
    $region8: #{tpu_custom_call.1} parent=1 // pred_region
      _
    $region9: #{tpu_custom_call.1} parent=1 // pred_fallthru
      _
    // Predicated region
    $region10: #{tpu_custom_call.1} parent=1 // pred_check
      _
    $region11: #{tpu_custom_call.1} parent=1 // pred_check_branch
      %16 = sbr.rel (0) target = $region13
    $region12: #{tpu_custom_call.1} parent=1 // pred_region
      _
    $region13: #{tpu_custom_call.1} parent=1 // pred_fallthru
      _
    // Predicated region
    $region14: #{tpu_custom_call.1} parent=1 // pred_check
      _
    $region15: #{tpu_custom_call.1} parent=1 // pred_check_branch
      %18 = sbr.rel (0) target = $region17
    $region16: #{tpu_custom_call.1} parent=1 // pred_region
      _
    $region17: #{tpu_custom_call.1} parent=1 // pred_fallthru
      _
    // Predicated region
    $region18: #{tpu_custom_call.1} parent=1 // pred_check
      _
    $region19: #{tpu_custom_call.1} parent=1 // pred_check_branch
      %20 = sbr.rel (0) target = $region21
    $region20: #{tpu_custom_call.1} parent=1 // pred_region
      _
    $region21: #{tpu_custom_call.1} parent=1 // pred_fallthru
      _
    %v21 = vld [vmem:[%s0] sm:$0xff]
    %v22 = vld [vmem:[%s0 + $0x8] sm:$0xff]
    %v23 = vld [vmem:[%s1] sm:$0xff]
    %v24 = vld [vmem:[%s1 + $0x8] sm:$0xff]
    %v25 = vld [vmem:[%s1 + $0x10] sm:$0xff]
    %v26 = vld [vmem:[%s1 + $0x18] sm:$0xff]
    %v27 = vld [vmem:[%s1 + $0x20] sm:$0xff]
    %v28 = vld [vmem:[%s1 + $0x28] sm:$0xff]
    %v29 = vld [vmem:[%s1 + $0x30] sm:$0xff]
    %v30 = vld [vmem:[%s1 + $0x38] sm:$0xff]
    %v31 = vld [vmem:[%s2] sm:$0x3]
    %v33 = vperm.slane %v31, 0
    %v34 = vperm.slane %v31, 1
    %vm37 = vcmask 261120
    %v39 = vsel %vm37, %v21, 0
    %v42 = vsel %vm37, %v22, 0
    %44 = vmatpush.msra.mxu0 0.0
    %45 = vmatpush.msra.mxu0 0.0
    %46 = vmatpush.msra.mxu0 0.0
    %47 = vmatpush.msra.mxu0 0.0
    %48 = vmatpush.msra.mxu0 0.0
    %49 = vmatpush.msra.mxu0 0.0
    %50 = vmatpush.msra.mxu0 0.0
    %51 = vmatpush.msra.mxu0 0.0
    %52 = vmatpush.msra.mxu0 0.0
    %53 = vmatpush.msra.mxu0 0.0
    %54 = vmatpush.msra.mxu0 0.0
    %55 = vmatpush.msra.mxu0 0.0
    %56 = vmatpush.msra.mxu0 %v29
    %57 = vmatpush.msra.mxu0 %v27
    %58 = vmatpush.msra.mxu0 %v25
    %59 = vmatpush.msra.mxu0 %v23
    %60 = vmatmul.f32.gmra.mxu0 %v39
    %v61 = vpop.f32.mrf.mxu0
    %v62 = vadd.f32 %v33, %v61
    %63 = vmatmul.f32.gmra.mxu0 %v42
    %v64 = vpop.f32.mrf.mxu0
    %v65 = vadd.f32 %v33, %v64
    %66 = vdwg.mxu0
    %67 = vmatpush.msra.mxu0 0.0
    %68 = vmatpush.msra.mxu0 0.0
    %69 = vmatpush.msra.mxu0 0.0
    %70 = vmatpush.msra.mxu0 0.0
    %71 = vmatpush.msra.mxu0 0.0
    %72 = vmatpush.msra.mxu0 0.0
    %73 = vmatpush.msra.mxu0 0.0
    %74 = vmatpush.msra.mxu0 0.0
    %75 = vmatpush.msra.mxu0 0.0
    %76 = vmatpush.msra.mxu0 0.0
    %77 = vmatpush.msra.mxu0 0.0
    %78 = vmatpush.msra.mxu0 0.0
    %79 = vmatpush.msra.mxu0 %v30
    %80 = vmatpush.msra.mxu0 %v28
    %81 = vmatpush.msra.mxu0 %v26
    %82 = vmatpush.msra.mxu0 %v24
    %83 = vmatmul.f32.gmra.mxu0 %v39
    %v84 = vpop.f32.mrf.mxu0
    %v85 = vadd.f32 %v34, %v84
    %86 = vmatmul.f32.gmra.mxu0 %v42
    %v87 = vpop.f32.mrf.mxu0
    %v88 = vadd.f32 %v34, %v87
    %89 = vdwg.mxu0
    %v90 = vmul.f32 %v62, 0.5
    %v91 = vmul.f32 %v85, 0.5
    %v92 = vmul.f32 %v65, 0.5
    %v93 = vmul.f32 %v88, 0.5
    %v94 = vmul.f32 %v62, 0.70710677
    %v95 = vmul.f32 %v85, 0.70710677
    %v96 = vmul.f32 %v65, 0.70710677
    %v97 = vmul.f32 %v88, 0.70710677
    %v98 = vmul.f32 %v94, %v94
    %v99 = vmin.f32 16.0, %v98
    %v100 = vmul.f32 %v99, 2.1237322e-06
    %v101 = vadd.f32 %v100, 0.00028619796
    %v102 = vmul.f32 %v99, %v101
    %v103 = vadd.f32 %v102, 0.0036580483
    %v104 = vmul.f32 %v99, %v103
    %v105 = vadd.f32 %v104, 0.05243302
    %v106 = vmul.f32 %v99, %v105
    %v107 = vadd.f32 %v106, 0.18741608
    %v108 = vmul.f32 %v99, %v107
    %v109 = vadd.f32 %v108, 1.1283791
    %v110 = vmul.f32 %v94, %v109
    %v111 = vmul.f32 %v99, 3.8918573e-05
    %v112 = vadd.f32 %v111, 0.001143296
    %v113 = vmul.f32 %v99, %v112
    %v114 = vadd.f32 %v113, 0.014752088
    %v115 = vmul.f32 %v99, %v114
    %v116 = vadd.f32 %v115, 0.112945676
    %v117 = vmul.f32 %v99, %v116
    %v118 = vadd.f32 %v117, 0.4994258
    %v119 = vmul.f32 %v99, %v118
    %v120 = vadd.f32 %v119, 1.0
    %v121 = vrcp.pop %v120
    %v122 = vmul.f32 %v120, %v121
    %v123 = vsub.f32 1.0, %v122
    %v124 = vmul.f32 %v121, %v123
    %v125 = vadd.f32 %v121, %v124
    %vm126 = vweird.f32 %v120
    %vm127 = vweird.f32 %v121
    %vm128 = vmor %vm126, %vm127
    %v129 = vsel %vm128, %v121, %v125
    %v130 = vand.u32 2147483647, %v120
    %vm131 = vcmp.eq.f32.partialorder %v130, 8.507059e+37
    %v132 = vand.u32 %v120, 2147483648
    %v133 = vor.u32 1.1754944e-38, %v132
    %v134 = vsel %vm131, %v133, %v129
    %v135 = vmul.f32 %v110, %v134
    %v136 = vmin.f32 %v135, 1.0
    %v137 = vmax.f32 %v136, -1.0
    %v138 = vmul.f32 %v95, %v95
    %v139 = vmin.f32 16.0, %v138
    %v140 = vmul.f32 %v139, 2.1237322e-06
    %v141 = vadd.f32 %v140, 0.00028619796
    %v142 = vmul.f32 %v139, %v141
    %v143 = vadd.f32 %v142, 0.0036580483
    %v144 = vmul.f32 %v139, %v143
    %v145 = vadd.f32 %v144, 0.05243302
    %v146 = vmul.f32 %v139, %v145
    %v147 = vadd.f32 %v146, 0.18741608
    %v148 = vmul.f32 %v139, %v147
    %v149 = vadd.f32 %v148, 1.1283791
    %v150 = vmul.f32 %v95, %v149
    %v151 = vmul.f32 %v139, 3.8918573e-05
    %v152 = vadd.f32 %v151, 0.001143296
    %v153 = vmul.f32 %v139, %v152
    %v154 = vadd.f32 %v153, 0.014752088
    %v155 = vmul.f32 %v139, %v154
    %v156 = vadd.f32 %v155, 0.112945676
    %v157 = vmul.f32 %v139, %v156
    %v158 = vadd.f32 %v157, 0.4994258
    %v159 = vmul.f32 %v139, %v158
    %v160 = vadd.f32 %v159, 1.0
    %v161 = vrcp.pop %v160
    %v162 = vmul.f32 %v160, %v161
    %v163 = vsub.f32 1.0, %v162
    %v164 = vmul.f32 %v161, %v163
    %v165 = vadd.f32 %v161, %v164
    %vm166 = vweird.f32 %v160
    %vm167 = vweird.f32 %v161
    %vm168 = vmor %vm166, %vm167
    %v169 = vsel %vm168, %v161, %v165
    %v170 = vand.u32 2147483647, %v160
    %vm171 = vcmp.eq.f32.partialorder %v170, 8.507059e+37
    %v172 = vand.u32 %v160, 2147483648
    %v173 = vor.u32 1.1754944e-38, %v172
    %v174 = vsel %vm171, %v173, %v169
    %v175 = vmul.f32 %v150, %v174
    %v176 = vmin.f32 %v175, 1.0
    %v177 = vmax.f32 %v176, -1.0
    %v178 = vmul.f32 %v96, %v96
    %v179 = vmin.f32 16.0, %v178
    %v180 = vmul.f32 %v179, 2.1237322e-06
    %v181 = vadd.f32 %v180, 0.00028619796
    %v182 = vmul.f32 %v179, %v181
    %v183 = vadd.f32 %v182, 0.0036580483
    %v184 = vmul.f32 %v179, %v183
    %v185 = vadd.f32 %v184, 0.05243302
    %v186 = vmul.f32 %v179, %v185
    %v187 = vadd.f32 %v186, 0.18741608
    %v188 = vmul.f32 %v179, %v187
    %v189 = vadd.f32 %v188, 1.1283791
    %v190 = vmul.f32 %v96, %v189
    %v191 = vmul.f32 %v179, 3.8918573e-05
    %v192 = vadd.f32 %v191, 0.001143296
    %v193 = vmul.f32 %v179, %v192
    %v194 = vadd.f32 %v193, 0.014752088
    %v195 = vmul.f32 %v179, %v194
    %v196 = vadd.f32 %v195, 0.112945676
    %v197 = vmul.f32 %v179, %v196
    %v198 = vadd.f32 %v197, 0.4994258
    %v199 = vmul.f32 %v179, %v198
    %v200 = vadd.f32 %v199, 1.0
    %v201 = vrcp.pop %v200
    %v202 = vmul.f32 %v200, %v201
    %v203 = vsub.f32 1.0, %v202
    %v204 = vmul.f32 %v201, %v203
    %v205 = vadd.f32 %v201, %v204
    %vm206 = vweird.f32 %v200
    %vm207 = vweird.f32 %v201
    %vm208 = vmor %vm206, %vm207
    %v209 = vsel %vm208, %v201, %v205
    %v210 = vand.u32 2147483647, %v200
    %vm211 = vcmp.eq.f32.partialorder %v210, 8.507059e+37
    %v212 = vand.u32 %v200, 2147483648
    %v213 = vor.u32 1.1754944e-38, %v212
    %v214 = vsel %vm211, %v213, %v209
    %v215 = vmul.f32 %v190, %v214
    %v216 = vmin.f32 %v215, 1.0
    %v217 = vmax.f32 %v216, -1.0
    %v218 = vmul.f32 %v97, %v97
    %v219 = vmin.f32 16.0, %v218
    %v220 = vmul.f32 %v219, 2.1237322e-06
    %v221 = vadd.f32 %v220, 0.00028619796
    %v222 = vmul.f32 %v219, %v221
    %v223 = vadd.f32 %v222, 0.0036580483
    %v224 = vmul.f32 %v219, %v223
    %v225 = vadd.f32 %v224, 0.05243302
    %v226 = vmul.f32 %v219, %v225
    %v227 = vadd.f32 %v226, 0.18741608
    %v228 = vmul.f32 %v219, %v227
    %v229 = vadd.f32 %v228, 1.1283791
    %v230 = vmul.f32 %v97, %v229
    %v231 = vmul.f32 %v219, 3.8918573e-05
    %v232 = vadd.f32 %v231, 0.001143296
    %v233 = vmul.f32 %v219, %v232
    %v234 = vadd.f32 %v233, 0.014752088
    %v235 = vmul.f32 %v219, %v234
    %v236 = vadd.f32 %v235, 0.112945676
    %v237 = vmul.f32 %v219, %v236
    %v238 = vadd.f32 %v237, 0.4994258
    %v239 = vmul.f32 %v219, %v238
    %v240 = vadd.f32 %v239, 1.0
    %v241 = vrcp.pop %v240
    %v242 = vmul.f32 %v240, %v241
    %v243 = vsub.f32 1.0, %v242
    %v244 = vmul.f32 %v241, %v243
    %v245 = vadd.f32 %v241, %v244
    %vm246 = vweird.f32 %v240
    %vm247 = vweird.f32 %v241
    %vm248 = vmor %vm246, %vm247
    %v249 = vsel %vm248, %v241, %v245
    %v250 = vand.u32 2147483647, %v240
    %vm251 = vcmp.eq.f32.partialorder %v250, 8.507059e+37
    %v252 = vand.u32 %v240, 2147483648
    %v253 = vor.u32 1.1754944e-38, %v252
    %v254 = vsel %vm251, %v253, %v249
    %v255 = vmul.f32 %v230, %v254
    %v256 = vmin.f32 %v255, 1.0
    %v257 = vmax.f32 %v256, -1.0
    %v258 = vadd.f32 %v137, 1.0
    %v259 = vadd.f32 %v177, 1.0
    %v260 = vadd.f32 %v217, 1.0
    %v261 = vadd.f32 %v257, 1.0
    %v262 = vmul.f32 %v90, %v258
    %v263 = vmul.f32 %v91, %v259
    %v264 = vmul.f32 %v92, %v260
    %v265 = vmul.f32 %v93, %v261
    %v266 = vld [vmem:[%s3] sm:$0xff]
    %v267 = vld [vmem:[%s3 + $0x8] sm:$0xff]
    %v268 = vld [vmem:[%s3 + $0x10] sm:$0xff]
    %v269 = vld [vmem:[%s3 + $0x18] sm:$0xff]
    %v270 = vld [vmem:[%s3 + $0x20] sm:$0xff]
    %v271 = vld [vmem:[%s3 + $0x28] sm:$0xff]
    %v272 = vld [vmem:[%s3 + $0x30] sm:$0xff]
    %v273 = vld [vmem:[%s3 + $0x38] sm:$0xff]
    %v274 = vld [vmem:[%s3 + $0x40] sm:$0xff]
    %v275 = vld [vmem:[%s3 + $0x48] sm:$0xff]
    %v276 = vld [vmem:[%s3 + $0x50] sm:$0xff]
    %v277 = vld [vmem:[%s3 + $0x58] sm:$0xff]
    %v278 = vld [vmem:[%s3 + $0x60] sm:$0xff]
    %v279 = vld [vmem:[%s3 + $0x68] sm:$0xff]
    %v280 = vld [vmem:[%s3 + $0x70] sm:$0xff]
    %v281 = vld [vmem:[%s3 + $0x78] sm:$0xff]
    %v282 = vld [vmem:[%s3 + $0x80] sm:$0xff]
    %v283 = vld [vmem:[%s3 + $0x88] sm:$0xff]
    %v284 = vld [vmem:[%s3 + $0x90] sm:$0xff]
    %v285 = vld [vmem:[%s3 + $0x98] sm:$0xff]
    %v286 = vld [vmem:[%s3 + $0xa0] sm:$0xff]
    %v287 = vld [vmem:[%s3 + $0xa8] sm:$0xff]
    %v288 = vld [vmem:[%s3 + $0xb0] sm:$0xff]
    %v289 = vld [vmem:[%s3 + $0xb8] sm:$0xff]
    %v290 = vld [vmem:[%s3 + $0xc0] sm:$0xff]
    %v291 = vld [vmem:[%s3 + $0xc8] sm:$0xff]
    %v292 = vld [vmem:[%s3 + $0xd0] sm:$0xff]
    %v293 = vld [vmem:[%s3 + $0xd8] sm:$0xff]
    %v294 = vld [vmem:[%s3 + $0xe0] sm:$0xff]
    %v295 = vld [vmem:[%s3 + $0xe8] sm:$0xff]
    %v296 = vld [vmem:[%s3 + $0xf0] sm:$0xff]
    %v297 = vld [vmem:[%s3 + $0xf8] sm:$0xff]
    %v298 = vld [vmem:[%s4] sm:$0x1]
    %v300 = vperm.slane %v298, 0
    %302 = vmatpush.msra.mxu0 %v281
    %303 = vmatpush.msra.mxu0 %v280
    %304 = vmatpush.msra.mxu0 %v279
    %305 = vmatpush.msra.mxu0 %v278
    %306 = vmatpush.msra.mxu0 %v277
    %307 = vmatpush.msra.mxu0 %v276
    %308 = vmatpush.msra.mxu0 %v275
    %309 = vmatpush.msra.mxu0 %v274
    %310 = vmatpush.msra.mxu0 %v273
    %311 = vmatpush.msra.mxu0 %v272
    %312 = vmatpush.msra.mxu0 %v271
    %313 = vmatpush.msra.mxu0 %v270
    %314 = vmatpush.msra.mxu0 %v269
    %315 = vmatpush.msra.mxu0 %v268
    %316 = vmatpush.msra.mxu0 %v267
    %317 = vmatpush.msra.mxu0 %v266
    %318 = vmatmul.f32.gmra.mxu0 %v262
    %v319 = vpop.f32.mrf.mxu0
    %v320 = vadd.f32 %v300, %v319
    %321 = vmatmul.f32.gmra.mxu0 %v264
    %v322 = vpop.f32.mrf.mxu0
    %v323 = vadd.f32 %v300, %v322
    %324 = vdwg.mxu0
    %325 = vmatpush.msra.mxu0 %v297
    %326 = vmatpush.msra.mxu0 %v296
    %327 = vmatpush.msra.mxu0 %v295
    %328 = vmatpush.msra.mxu0 %v294
    %329 = vmatpush.msra.mxu0 %v293
    %330 = vmatpush.msra.mxu0 %v292
    %331 = vmatpush.msra.mxu0 %v291
    %332 = vmatpush.msra.mxu0 %v290
    %333 = vmatpush.msra.mxu0 %v289
    %334 = vmatpush.msra.mxu0 %v288
    %335 = vmatpush.msra.mxu0 %v287
    %336 = vmatpush.msra.mxu0 %v286
    %337 = vmatpush.msra.mxu0 %v285
    %338 = vmatpush.msra.mxu0 %v284
    %339 = vmatpush.msra.mxu0 %v283
    %340 = vmatpush.msra.mxu0 %v282
    %341 = vmatmul.f32.gmra.mxu0 %v263
    %v342 = vpop.f32.mrf.mxu0
    %v343 = vadd.f32 %v320, %v342
    %344 = vmatmul.f32.gmra.mxu0 %v265
    %v345 = vpop.f32.mrf.mxu0
    %v346 = vadd.f32 %v323, %v345
    %347 = vdwg.mxu0
    %348 = vst.msk [vmem:[#allocation2] sm:$0xff] %vm37, %v343
    %349 = vst.msk [vmem:[#allocation2 + $0x8] sm:$0xff] %vm37, %v346
    // Predicated region
    $region22: #{tpu_custom_call.1} parent=1 // pred_check
      _
    $region23: #{tpu_custom_call.1} parent=1 // pred_check_branch
      %351 = sbr.rel (0) target = $region25
    $region24: #{tpu_custom_call.1} parent=1 // pred_region
      %353 = vsyncadd [#allocation3], 0
      %s354 = sshll.u32 [#allocation2], 4
      %s355 = int_to_ptr.vmem [resolvable:$true] %s354
      %s356 = sshll.u32 %s5, 4
      %s357 = int_to_ptr.hbm [resolvable:$true] %s356
      %362 = dma.vmem_to_hbm [thread:$0]  %s355, 256, %s357, [#allocation3], 128, 128, 8
    $region25: #{tpu_custom_call.1} parent=1 // pred_fallthru
      _
    // Predicated region
    $region26: #{tpu_custom_call.1} parent=1 // pred_check
      _
    $region27: #{tpu_custom_call.1} parent=1 // pred_check_branch
      %364 = sbr.rel (0) target = $region29
    $region28: #{tpu_custom_call.1} parent=1 // pred_region
      %366 = dma.done [#allocation3], 256
    $region29: #{tpu_custom_call.1} parent=1 // pred_fallthru
      _
    %367 = vsyncpa [#allocation3], 1

</llo_original>
